<compile_context>
chip_gen: v7x
topology: tpu7x:2x2x1
jax: 0.10.0
libtpu: 0.0.40
codegen_flags: <defaults>
</compile_context>

<pallas_src>
import jax
import jax.numpy as jnp
from jax.experimental import pallas as pl
from jax.experimental.pallas import tpu as pltpu

_EPS = 1e-5
_LANE = 128
_SUBLANE = 8
_MAX_TILE_C = 2048
_SMALL_FALLBACK_ELEMS = 64 * 1024


def _round_up(v, m):
    return (v + m - 1) // m * m


def _vmem_budget_bytes():
    """Per-generation budget for the double-buffered VMEM working set."""
    phys = 64 << 20                        # assume smallest (v7x per-core) if unknown
    try:
        info = pltpu.get_tpu_info()
        phys = int(getattr(info, "vmem_capacity_bytes", phys))
    except Exception:
        pass
    if phys >= (96 << 20):                 # v5e / v6e: 128 MiB physical VMEM
        return 24 << 20
    return 14 << 20                        # v7x: 64 MiB physical, leave headroom


def _bn_reference(x, gamma, beta, eps=_EPS):
    """Pure-JAX training-mode BatchNorm1d forward (also the tiny-shape path)."""
    xf = x.astype(jnp.float32)
    mean = jnp.mean(xf, axis=0, keepdims=True)
    var = jnp.mean((xf - mean) ** 2, axis=0, keepdims=True)
    g = gamma.astype(jnp.float32).reshape(1, -1)
    b = beta.astype(jnp.float32).reshape(1, -1)
    return (xf - mean) / jnp.sqrt(var + eps) * g + b


# ---------------------------------------------------------------------------
# Kernels
# ---------------------------------------------------------------------------

def _make_fused_kernel(n, c, tc, eps):
    """Full-N slab per C tile: stats + normalize in one sweep (x read once)."""
    inv_n = 1.0 / n

    def kernel(x_ref, g_ref, b_ref, o_ref):
        ci = pl.program_id(0)
        x = x_ref[...].astype(jnp.float32)
        cols = jax.lax.broadcasted_iota(jnp.int32, x.shape, 1)
        valid = cols < (c - ci * tc)                   # mask ragged feature edge
        xm = jnp.where(valid, x, 0.0)
        mean = jnp.sum(xm, axis=0, keepdims=True) * inv_n
        centered = jnp.where(valid, xm - mean, 0.0)    # centered 2nd sweep: no cancellation
        var = jnp.sum(centered * centered, axis=0, keepdims=True) * inv_n
        scale = jax.lax.rsqrt(var + eps) * g_ref[...].astype(jnp.float32)
        shift = b_ref[...].astype(jnp.float32) - mean * scale
        o_ref[...] = (x * scale + shift).astype(o_ref.dtype)

    return kernel


def _make_stats_kernel(n, c, tn, tc, eps):
    """Pass 1: per-column (mean, M2) over N row blocks via Chan's merge.

    scale_ref holds the running mean, shift_ref the running M2; at the last
    row block they are overwritten with the folded (scale, shift).
    """

    def kernel(x_ref, g_ref, b_ref, scale_ref, shift_ref):
        ci = pl.program_id(0)
        ni = pl.program_id(1)

        @pl.when(ni == 0)
        def _():
            scale_ref[...] = jnp.zeros_like(scale_ref)   # running mean
            shift_ref[...] = jnp.zeros_like(shift_ref)   # running M2

        x = x_ref[...].astype(jnp.float32)
        rows = jax.lax.broadcasted_iota(jnp.int32, x.shape, 0)
        cols = jax.lax.broadcasted_iota(jnp.int32, x.shape, 1)
        row_start = ni * tn
        valid = (rows < (n - row_start)) & (cols < (c - ci * tc))
        xm = jnp.where(valid, x, 0.0)

        n_b = jnp.minimum(tn, n - row_start).astype(jnp.float32)  # valid rows in block
        block_mean = jnp.sum(xm, axis=0, keepdims=True) / n_b
        centered = jnp.where(valid, xm - block_mean, 0.0)
        block_m2 = jnp.sum(centered * centered, axis=0, keepdims=True)

        # Chan parallel merge of running (mean, M2) with this block's stats.
        n_a = (ni * tn).astype(jnp.float32)
        n_ab = n_a + n_b
        mean_a = scale_ref[...]
        m2_a = shift_ref[...]
        delta = block_mean - mean_a
        scale_ref[...] = mean_a + delta * (n_b / n_ab)
        shift_ref[...] = m2_a + block_m2 + (delta * delta) * (n_a * n_b / n_ab)

        @pl.when(ni == pl.num_programs(1) - 1)
        def _():
            mean = scale_ref[...]
            var = shift_ref[...] * (1.0 / n)             # biased variance
            sc = jax.lax.rsqrt(var + eps) * g_ref[...].astype(jnp.float32)
            sh = b_ref[...].astype(jnp.float32) - mean * sc
            scale_ref[...] = sc
            shift_ref[...] = sh

    return kernel


def _apply_kernel(x_ref, scale_ref, shift_ref, o_ref):
    """Pass 2: y = x * scale + shift (fully parallel over row/feature blocks)."""
    x = x_ref[...].astype(jnp.float32)
    o_ref[...] = (x * scale_ref[...] + shift_ref[...]).astype(o_ref.dtype)


# ---------------------------------------------------------------------------
# Wrapper
# ---------------------------------------------------------------------------

def batch_norm_1d_safe(x, gamma, beta, *, eps=_EPS,
                       force_two_pass=False, max_rows_per_block=None):
    """BatchNorm1dSafe forward. x: (N, C); gamma/beta: (C,)."""
    n, c = x.shape
    if n == 1:
        return x                                        # BatchNorm1dSafe pass-through
    if n * c < _SMALL_FALLBACK_ELEMS and not force_two_pass:
        return _bn_reference(x, gamma, beta, eps).astype(x.dtype)

    g2 = gamma.astype(jnp.float32).reshape(1, c)
    b2 = beta.astype(jnp.float32).reshape(1, c)

    budget = _vmem_budget_bytes()
    vmem_limit = budget + (16 << 20)
    itemsize = x.dtype.itemsize
    c_cap = min(_MAX_TILE_C, _round_up(c, _LANE))

    # ----- fused single-sweep path (full N rows resident per C tile) -----
    # footprint/elem ~= double-buffered x+y DMA tiles + f32 working copies.
    fused_bpe = 4 * itemsize + 8
    tc_fused = min((budget // (n * fused_bpe)) // _LANE * _LANE, c_cap)
    if not force_two_pass and tc_fused >= min(512, c_cap):
        return pl.pallas_call(
            _make_fused_kernel(n, c, tc_fused, eps),
            out_shape=jax.ShapeDtypeStruct((n, c), x.dtype),
            grid=(pl.cdiv(c, tc_fused),),
            in_specs=[
                pl.BlockSpec((n, tc_fused), lambda j: (0, j)),
                pl.BlockSpec((1, tc_fused), lambda j: (0, j)),
                pl.BlockSpec((1, tc_fused), lambda j: (0, j)),
            ],
            out_specs=pl.BlockSpec((n, tc_fused), lambda j: (0, j)),
            compiler_params=pltpu.CompilerParams(
                dimension_semantics=("parallel",),
                vmem_limit_bytes=vmem_limit,
            ),
        )(x, g2, b2)

    # ----- two-pass path: N-tiled stats accumulation + parallel normalize -----
    tc = c_cap
    bytes_per_row = tc * (4 * itemsize + 4)             # dominant (normalize) footprint
    tn = (budget // bytes_per_row) // _SUBLANE * _SUBLANE
    if max_rows_per_block is not None:
        tn = min(tn, _round_up(max_rows_per_block, _SUBLANE))
    tn = max(_SUBLANE, min(tn, _round_up(n, _SUBLANE)))
    num_c = pl.cdiv(c, tc)
    num_n = pl.cdiv(n, tn)

    scale, shift = pl.pallas_call(
        _make_stats_kernel(n, c, tn, tc, eps),
        out_shape=(jax.ShapeDtypeStruct((1, c), jnp.float32),
                   jax.ShapeDtypeStruct((1, c), jnp.float32)),
        grid=(num_c, num_n),                             # reduction axis (N) innermost
        in_specs=[
            pl.BlockSpec((tn, tc), lambda ci, ni: (ni, ci)),
            pl.BlockSpec((1, tc), lambda ci, ni: (0, ci)),
            pl.BlockSpec((1, tc), lambda ci, ni: (0, ci)),
        ],
        out_specs=(pl.BlockSpec((1, tc), lambda ci, ni: (0, ci)),
                   pl.BlockSpec((1, tc), lambda ci, ni: (0, ci))),
        compiler_params=pltpu.CompilerParams(
            dimension_semantics=("parallel", "arbitrary"),
            vmem_limit_bytes=vmem_limit,
        ),
    )(x, g2, b2)

    return pl.pallas_call(
        _apply_kernel,
        out_shape=jax.ShapeDtypeStruct((n, c), x.dtype),
        grid=(num_n, num_c),                             # fully parallel normalize pass
        in_specs=[
            pl.BlockSpec((tn, tc), lambda ni, ci: (ni, ci)),
            pl.BlockSpec((1, tc), lambda ni, ci: (0, ci)),
            pl.BlockSpec((1, tc), lambda ni, ci: (0, ci)),
        ],
        out_specs=pl.BlockSpec((tn, tc), lambda ni, ci: (ni, ci)),
        compiler_params=pltpu.CompilerParams(
            dimension_semantics=("parallel", "parallel"),
            vmem_limit_bytes=vmem_limit,
        ),
    )(x, scale, shift)


# ---------------------------------------------------------------------------
# Demo / self-test
# ---------------------------------------------------------------------------

if __name__ == "__main__":
    key = jax.random.PRNGKey(0)
    k1, k2, k3, k4, k5 = jax.random.split(key, 5)

    # 1) N == 1: identity path.
    x1 = jax.random.normal(k1, (1, 32), dtype=jnp.float32)
    out1 = jax.block_until_ready(batch_norm_1d_safe(
        x1, jnp.ones((32,), jnp.float32), jnp.zeros((32,), jnp.float32)))
    assert jnp.array_equal(out1, x1), "N==1 path must be identity"

    # 2) Tiny problem: jnp fallback path (PyTorch default weight=1, bias=0).
    xs = jax.random.normal(k2, (8, 32), dtype=jnp.float32)
    gs = jnp.ones((32,), jnp.float32)
    bs = jnp.zeros((32,), jnp.float32)
    outs = jax.block_until_ready(batch_norm_1d_safe(xs, gs, bs))
    refs = _bn_reference(xs, gs, bs)
    assert jnp.allclose(outs, refs, atol=1e-4, rtol=1e-4), "small fallback mismatch"

    # 3) Fused single-sweep kernel path (ragged C = 200 exercises edge masking).
    N1, C1 = 512, 200
    xf = jax.random.normal(k3, (N1, C1), dtype=jnp.float32)
    gf = 1.0 + 0.1 * jax.random.normal(k4, (C1,), dtype=jnp.float32)
    bf = 0.1 * jax.random.normal(k5, (C1,), dtype=jnp.float32)
    outf = jax.block_until_ready(batch_norm_1d_safe(xf, gf, bf))
    reff = _bn_reference(xf, gf, bf)
    assert jnp.allclose(outf, reff, atol=1e-4, rtol=1e-4), "fused kernel mismatch"

    # 4) Two-pass (N-tiled) kernel path: ragged N (1037) and ragged C (300),
    #    forced with small row blocks so the Chan stats merge is exercised.
    N2, C2 = 1037, 300
    xt = jax.random.normal(k3, (N2, C2), dtype=jnp.float32)
    gt = 1.0 + 0.1 * jax.random.normal(k4, (C2,), dtype=jnp.float32)
    bt = 0.1 * jax.random.normal(k5, (C2,), dtype=jnp.float32)
    outt = jax.block_until_ready(batch_norm_1d_safe(
        xt, gt, bt, force_two_pass=True, max_rows_per_block=256))
    reft = _bn_reference(xt, gt, bt)
    assert jnp.allclose(outt, reft, atol=1e-4, rtol=1e-4), "two-pass kernel mismatch"

    print("KERNEL_OK")
</pallas_src>

<mosaic_0001>
module attributes {stable_mosaic.version = 11 : i64} {
  func.func @kernel(%arg0: i32, %arg1: memref<512x256xf32, #tpu.memory_space<vmem>>, %arg2: memref<1x256xf32, #tpu.memory_space<vmem>>, %arg3: memref<1x256xf32, #tpu.memory_space<vmem>>, %arg4: memref<512x256xf32, #tpu.memory_space<vmem>>) attributes {dimension_semantics = [#tpu.dimension_semantics<parallel>], iteration_bounds = array<i64: 1>, scalar_prefetch = 0 : i64, scratch_operands = 0 : i64, tpu.core_type = #tpu.core_type<tc>, window_params = [{transform_indices = @transform_0, window_bounds = array<i64: 512, 256>}, {transform_indices = @transform_1, window_bounds = array<i64: 1, 256>}, {transform_indices = @transform_2, window_bounds = array<i64: 1, 256>}, {transform_indices = @transform_3, window_bounds = array<i64: 512, 256>}]} {
    %c0 = arith.constant 0 : index
    %c0_0 = arith.constant 0 : index
    %0 = vector.load %arg1[%c0, %c0_0] : memref<512x256xf32, #tpu.memory_space<vmem>>, vector<512x256xf32>
    %1 = tpu.iota {dimensions = array<i32: 1>} : vector<512x256xi32>
    %c256_i32 = arith.constant 256 : i32
    %2 = arith.muli %arg0, %c256_i32 : i32
    %c200_i32 = arith.constant 200 : i32
    %3 = arith.subi %c200_i32, %2 : i32
    %4 = vector.broadcast %3 : i32 to vector<512x256xi32>
    %5 = arith.cmpi slt, %1, %4 : vector<512x256xi32>
    %cst = arith.constant 0.000000e+00 : f32
    %6 = vector.broadcast %cst : f32 to vector<512x256xf32>
    %7 = arith.select %5, %0, %6 : vector<512x256xi1>, vector<512x256xf32>
    %cst_1 = arith.constant dense<0.000000e+00> : vector<256xf32>
    %8 = vector.multi_reduction <add>, %7, %cst_1 [0] : vector<512x256xf32> to vector<256xf32>
    %9 = vector.shape_cast %8 : vector<256xf32> to vector<1x256xf32>
    %cst_2 = arith.constant 0.001953125 : f32
    %10 = vector.broadcast %cst_2 : f32 to vector<1x256xf32>
    %11 = arith.mulf %9, %10 : vector<1x256xf32>
    %12 = vector.broadcast %11 : vector<1x256xf32> to vector<512x256xf32>
    %13 = arith.subf %7, %12 : vector<512x256xf32>
    %cst_3 = arith.constant 0.000000e+00 : f32
    %14 = vector.broadcast %cst_3 : f32 to vector<512x256xf32>
    %15 = arith.select %5, %13, %14 : vector<512x256xi1>, vector<512x256xf32>
    %16 = arith.mulf %15, %15 : vector<512x256xf32>
    %cst_4 = arith.constant dense<0.000000e+00> : vector<256xf32>
    %17 = vector.multi_reduction <add>, %16, %cst_4 [0] : vector<512x256xf32> to vector<256xf32>
    %18 = vector.shape_cast %17 : vector<256xf32> to vector<1x256xf32>
    %cst_5 = arith.constant 0.001953125 : f32
    %19 = vector.broadcast %cst_5 : f32 to vector<1x256xf32>
    %20 = arith.mulf %18, %19 : vector<1x256xf32>
    %cst_6 = arith.constant 9.99999974E-6 : f32
    %21 = vector.broadcast %cst_6 : f32 to vector<1x256xf32>
    %22 = arith.addf %20, %21 : vector<1x256xf32>
    %23 = math.rsqrt %22 : vector<1x256xf32>
    %c0_7 = arith.constant 0 : index
    %c0_8 = arith.constant 0 : index
    %24 = vector.load %arg2[%c0_7, %c0_8] : memref<1x256xf32, #tpu.memory_space<vmem>>, vector<1x256xf32>
    %25 = arith.mulf %23, %24 : vector<1x256xf32>
    %c0_9 = arith.constant 0 : index
    %c0_10 = arith.constant 0 : index
    %26 = vector.load %arg3[%c0_9, %c0_10] : memref<1x256xf32, #tpu.memory_space<vmem>>, vector<1x256xf32>
    %27 = arith.mulf %11, %25 : vector<1x256xf32>
    %28 = arith.subf %26, %27 : vector<1x256xf32>
    %29 = vector.broadcast %25 : vector<1x256xf32> to vector<512x256xf32>
    %30 = arith.mulf %0, %29 : vector<512x256xf32>
    %31 = vector.broadcast %28 : vector<1x256xf32> to vector<512x256xf32>
    %32 = arith.addf %30, %31 : vector<512x256xf32>
    %c0_11 = arith.constant 0 : index
    %c0_12 = arith.constant 0 : index
    %33 = vector.load %arg4[%c0_11, %c0_12] : memref<512x256xf32, #tpu.memory_space<vmem>>, vector<512x256xf32>
    tpu.vector_store %arg4[%c0_11, %c0_12], %32 {strides = array<i32>} : memref<512x256xf32, #tpu.memory_space<vmem>>, vector<512x256xf32>,
    return
  }
  func.func @transform_0(%arg0: i32) -> (i32, i32) {
    %c0_i32 = arith.constant 0 : i32
    %c0_i32_0 = arith.constant 0 : i32
    return %c0_i32, %arg0 : i32, i32
  }
  func.func @transform_1(%arg0: i32) -> (i32, i32) {
    %c0_i32 = arith.constant 0 : i32
    %c0_i32_0 = arith.constant 0 : i32
    return %c0_i32, %arg0 : i32, i32
  }
  func.func @transform_2(%arg0: i32) -> (i32, i32) {
    %c0_i32 = arith.constant 0 : i32
    %c0_i32_0 = arith.constant 0 : i32
    return %c0_i32, %arg0 : i32, i32
  }
  func.func @transform_3(%arg0: i32) -> (i32, i32) {
    %c0_i32 = arith.constant 0 : i32
    %c0_i32_0 = arith.constant 0 : i32
    return %c0_i32, %arg0 : i32, i32
  }
}

</mosaic_0001>

<llo_original>
// kernel: tpu_custom_call.1
$region0: #{tpu_custom_call.1}
  #allocation0 [shape = 'u32[]', space=smem, size = 0x4, offset = 0x4, fixed_abs, tag = 'smem constant byte address 0x4 - core index']
  #allocation1 [shape = 'u32[144,128]{1,0:T(1,128)}', space=vmem, size = 0x12000, scoped, tag = 'internal scratch']
  %s0 = inlined_call_operand.vmem [shape: f32[512,200], index: 0, kind: input, shape index: {}]
  %s1 = inlined_call_operand.vmem [shape: f32[1,200], index: 1, kind: input, shape index: {}]
  %s2 = inlined_call_operand.vmem [shape: f32[1,200], index: 2, kind: input, shape index: {}]
  %s3 = inlined_call_operand.vmem [shape: f32[512,200], index: 3, kind: output, shape index: {}]
  %s4 = sld [smem:[#allocation0]]
  $region22: #{tpu_custom_call.1} parent=0
    _
  %s6 = ssub.s32 1, %s4
  %s7 = scalar_select 0, %s6, %s4
  // Predicated region
  $region2: #{tpu_custom_call.1} parent=0 // pred_check
    _
  $region3: #{tpu_custom_call.1} parent=0 // pred_check_branch
    %9 = sbr.rel (0) target = $region5
  $region4: #{tpu_custom_call.1} parent=0 // pred_region
    _
  $region5: #{tpu_custom_call.1} parent=0 // pred_fallthru
    _
  // Predicated region
  $region6: #{tpu_custom_call.1} parent=0 // pred_check
    _
  $region7: #{tpu_custom_call.1} parent=0 // pred_check_branch
    %11 = sbr.rel (0) target = $region9
  $region8: #{tpu_custom_call.1} parent=0 // pred_region
    _
  $region9: #{tpu_custom_call.1} parent=0 // pred_fallthru
    _
  // Predicated region
  $region10: #{tpu_custom_call.1} parent=0 // pred_check
    _
  $region11: #{tpu_custom_call.1} parent=0 // pred_check_branch
    %13 = sbr.rel (0) target = $region13
  $region12: #{tpu_custom_call.1} parent=0 // pred_region
    _
  $region13: #{tpu_custom_call.1} parent=0 // pred_fallthru
    _
  %v14 = vld [vmem:[%s0] sm:$0xff]
  %v15 = vld [vmem:[%s0 + $0x8] sm:$0xff]
  %v16 = vld [vmem:[%s0 + $0x10] sm:$0xff]
  %v17 = vld [vmem:[%s0 + $0x18] sm:$0xff]
  %v18 = vld [vmem:[%s0 + $0x20] sm:$0xff]
  %v19 = vld [vmem:[%s0 + $0x28] sm:$0xff]
  %v20 = vld [vmem:[%s0 + $0x30] sm:$0xff]
  %v21 = vld [vmem:[%s0 + $0x38] sm:$0xff]
  %v22 = vld [vmem:[%s0 + $0x40] sm:$0xff]
  %v23 = vld [vmem:[%s0 + $0x48] sm:$0xff]
  %v24 = vld [vmem:[%s0 + $0x50] sm:$0xff]
  %v25 = vld [vmem:[%s0 + $0x58] sm:$0xff]
  %v26 = vld [vmem:[%s0 + $0x60] sm:$0xff]
  %v27 = vld [vmem:[%s0 + $0x68] sm:$0xff]
  %v28 = vld [vmem:[%s0 + $0x70] sm:$0xff]
  %v29 = vld [vmem:[%s0 + $0x78] sm:$0xff]
  %v30 = vld [vmem:[%s0 + $0x80] sm:$0xff]
  %v31 = vld [vmem:[%s0 + $0x88] sm:$0xff]
  %v32 = vld [vmem:[%s0 + $0x90] sm:$0xff]
  %v33 = vld [vmem:[%s0 + $0x98] sm:$0xff]
  %v34 = vld [vmem:[%s0 + $0xa0] sm:$0xff]
  %v35 = vld [vmem:[%s0 + $0xa8] sm:$0xff]
  %v36 = vld [vmem:[%s0 + $0xb0] sm:$0xff]
  %v37 = vld [vmem:[%s0 + $0xb8] sm:$0xff]
  %v38 = vld [vmem:[%s0 + $0xc0] sm:$0xff]
  %v39 = vld [vmem:[%s0 + $0xc8] sm:$0xff]
  %v40 = vld [vmem:[%s0 + $0xd0] sm:$0xff]
  %v41 = vld [vmem:[%s0 + $0xd8] sm:$0xff]
  %v42 = vld [vmem:[%s0 + $0xe0] sm:$0xff]
  %v43 = vld [vmem:[%s0 + $0xe8] sm:$0xff]
  %v44 = vld [vmem:[%s0 + $0xf0] sm:$0xff]
  %v45 = vld [vmem:[%s0 + $0xf8] sm:$0xff]
  %v46 = vld [vmem:[%s0 + $0x100] sm:$0xff]
  %v47 = vld [vmem:[%s0 + $0x108] sm:$0xff]
  %v48 = vld [vmem:[%s0 + $0x110] sm:$0xff]
  %v49 = vld [vmem:[%s0 + $0x118] sm:$0xff]
  %v50 = vld [vmem:[%s0 + $0x120] sm:$0xff]
  %v51 = vld [vmem:[%s0 + $0x128] sm:$0xff]
  %v52 = vld [vmem:[%s0 + $0x130] sm:$0xff]
  %v53 = vld [vmem:[%s0 + $0x138] sm:$0xff]
  %v54 = vld [vmem:[%s0 + $0x140] sm:$0xff]
  %v55 = vld [vmem:[%s0 + $0x148] sm:$0xff]
  %v56 = vld [vmem:[%s0 + $0x150] sm:$0xff]
  %v57 = vld [vmem:[%s0 + $0x158] sm:$0xff]
  %v58 = vld [vmem:[%s0 + $0x160] sm:$0xff]
  %v59 = vld [vmem:[%s0 + $0x168] sm:$0xff]
  %v60 = vld [vmem:[%s0 + $0x170] sm:$0xff]
  %v61 = vld [vmem:[%s0 + $0x178] sm:$0xff]
  %v62 = vld [vmem:[%s0 + $0x180] sm:$0xff]
  %v63 = vld [vmem:[%s0 + $0x188] sm:$0xff]
  %v64 = vld [vmem:[%s0 + $0x190] sm:$0xff]
  %v65 = vld [vmem:[%s0 + $0x198] sm:$0xff]
  %v66 = vld [vmem:[%s0 + $0x1a0] sm:$0xff]
  %v67 = vld [vmem:[%s0 + $0x1a8] sm:$0xff]
  %v68 = vld [vmem:[%s0 + $0x1b0] sm:$0xff]
  %v69 = vld [vmem:[%s0 + $0x1b8] sm:$0xff]
  %v70 = vld [vmem:[%s0 + $0x1c0] sm:$0xff]
  %v71 = vld [vmem:[%s0 + $0x1c8] sm:$0xff]
  %v72 = vld [vmem:[%s0 + $0x1d0] sm:$0xff]
  %v73 = vld [vmem:[%s0 + $0x1d8] sm:$0xff]
  %v74 = vld [vmem:[%s0 + $0x1e0] sm:$0xff]
  %v75 = vld [vmem:[%s0 + $0x1e8] sm:$0xff]
  %v76 = vld [vmem:[%s0 + $0x1f0] sm:$0xff]
  %v77 = vld [vmem:[%s0 + $0x1f8] sm:$0xff]
  %v78 = vld [vmem:[%s0 + $0x200] sm:$0xff]
  %v79 = vld [vmem:[%s0 + $0x208] sm:$0xff]
  %v80 = vld [vmem:[%s0 + $0x210] sm:$0xff]
  %v81 = vld [vmem:[%s0 + $0x218] sm:$0xff]
  %v82 = vld [vmem:[%s0 + $0x220] sm:$0xff]
  %v83 = vld [vmem:[%s0 + $0x228] sm:$0xff]
  %v84 = vld [vmem:[%s0 + $0x230] sm:$0xff]
  %v85 = vld [vmem:[%s0 + $0x238] sm:$0xff]
  %v86 = vld [vmem:[%s0 + $0x240] sm:$0xff]
  %v87 = vld [vmem:[%s0 + $0x248] sm:$0xff]
  %v88 = vld [vmem:[%s0 + $0x250] sm:$0xff]
  %v89 = vld [vmem:[%s0 + $0x258] sm:$0xff]
  %v90 = vld [vmem:[%s0 + $0x260] sm:$0xff]
  %v91 = vld [vmem:[%s0 + $0x268] sm:$0xff]
  %v92 = vld [vmem:[%s0 + $0x270] sm:$0xff]
  %v93 = vld [vmem:[%s0 + $0x278] sm:$0xff]
  %v94 = vld [vmem:[%s0 + $0x280] sm:$0xff]
  %v95 = vld [vmem:[%s0 + $0x288] sm:$0xff]
  %v96 = vld [vmem:[%s0 + $0x290] sm:$0xff]
  %v97 = vld [vmem:[%s0 + $0x298] sm:$0xff]
  %v98 = vld [vmem:[%s0 + $0x2a0] sm:$0xff]
  %v99 = vld [vmem:[%s0 + $0x2a8] sm:$0xff]
  %v100 = vld [vmem:[%s0 + $0x2b0] sm:$0xff]
  %v101 = vld [vmem:[%s0 + $0x2b8] sm:$0xff]
  %v102 = vld [vmem:[%s0 + $0x2c0] sm:$0xff]
  %v103 = vld [vmem:[%s0 + $0x2c8] sm:$0xff]
  %v104 = vld [vmem:[%s0 + $0x2d0] sm:$0xff]
  %v105 = vld [vmem:[%s0 + $0x2d8] sm:$0xff]
  %v106 = vld [vmem:[%s0 + $0x2e0] sm:$0xff]
  %v107 = vld [vmem:[%s0 + $0x2e8] sm:$0xff]
  %v108 = vld [vmem:[%s0 + $0x2f0] sm:$0xff]
  %v109 = vld [vmem:[%s0 + $0x2f8] sm:$0xff]
  %v110 = vld [vmem:[%s0 + $0x300] sm:$0xff]
  %v111 = vld [vmem:[%s0 + $0x308] sm:$0xff]
  %v112 = vld [vmem:[%s0 + $0x310] sm:$0xff]
  %v113 = vld [vmem:[%s0 + $0x318] sm:$0xff]
  %v114 = vld [vmem:[%s0 + $0x320] sm:$0xff]
  %v115 = vld [vmem:[%s0 + $0x328] sm:$0xff]
  %v116 = vld [vmem:[%s0 + $0x330] sm:$0xff]
  %v117 = vld [vmem:[%s0 + $0x338] sm:$0xff]
  %v118 = vld [vmem:[%s0 + $0x340] sm:$0xff]
  %v119 = vld [vmem:[%s0 + $0x348] sm:$0xff]
  %v120 = vld [vmem:[%s0 + $0x350] sm:$0xff]
  %v121 = vld [vmem:[%s0 + $0x358] sm:$0xff]
  %v122 = vld [vmem:[%s0 + $0x360] sm:$0xff]
  %v123 = vld [vmem:[%s0 + $0x368] sm:$0xff]
  %v124 = vld [vmem:[%s0 + $0x370] sm:$0xff]
  %v125 = vld [vmem:[%s0 + $0x378] sm:$0xff]
  %v126 = vld [vmem:[%s0 + $0x380] sm:$0xff]
  %v127 = vld [vmem:[%s0 + $0x388] sm:$0xff]
  %v128 = vld [vmem:[%s0 + $0x390] sm:$0xff]
  %v129 = vld [vmem:[%s0 + $0x398] sm:$0xff]
  %v130 = vld [vmem:[%s0 + $0x3a0] sm:$0xff]
  %v131 = vld [vmem:[%s0 + $0x3a8] sm:$0xff]
  %v132 = vld [vmem:[%s0 + $0x3b0] sm:$0xff]
  %v133 = vld [vmem:[%s0 + $0x3b8] sm:$0xff]
  %v134 = vld [vmem:[%s0 + $0x3c0] sm:$0xff]
  %v135 = vld [vmem:[%s0 + $0x3c8] sm:$0xff]
  %v136 = vld [vmem:[%s0 + $0x3d0] sm:$0xff]
  %v137 = vld [vmem:[%s0 + $0x3d8] sm:$0xff]
  %v138 = vld [vmem:[%s0 + $0x3e0] sm:$0xff]
  %v139 = vld [vmem:[%s0 + $0x3e8] sm:$0xff]
  %v140 = vld [vmem:[%s0 + $0x3f0] sm:$0xff]
  %v141 = vld [vmem:[%s0 + $0x3f8] sm:$0xff]
  %v142 = vlaneseq
  %v143 = vand.u32 %v142, 127
  %v144 = vadd.s32 %v143, 128
  %s145 = smul.u32 0, 256
  %s146 = ssub.s32 200, %s145
  %v147 = vstv %s146
  %vm148 = vcmp.lt.s32.totalorder %v143, %v147
  %vm149 = vcmp.lt.s32.totalorder %v144, %v147
  %v150 = vsel %vm148, %v14, 0.0
  %v151 = vsel %vm149, %v15, 0.0
  %v152 = vsel %vm148, %v16, 0.0
  %v153 = vsel %vm149, %v17, 0.0
  %v154 = vsel %vm148, %v18, 0.0
  %v155 = vsel %vm149, %v19, 0.0
  %v156 = vsel %vm148, %v20, 0.0
  %v157 = vsel %vm149, %v21, 0.0
  %v158 = vsel %vm148, %v22, 0.0
  %v159 = vsel %vm149, %v23, 0.0
  %v160 = vsel %vm148, %v24, 0.0
  %v161 = vsel %vm149, %v25, 0.0
  %v162 = vsel %vm148, %v26, 0.0
  %v163 = vsel %vm149, %v27, 0.0
  %v164 = vsel %vm148, %v28, 0.0
  %v165 = vsel %vm149, %v29, 0.0
  %v166 = vsel %vm148, %v30, 0.0
  %v167 = vsel %vm149, %v31, 0.0
  %v168 = vsel %vm148, %v32, 0.0
  %v169 = vsel %vm149, %v33, 0.0
  %v170 = vsel %vm148, %v34, 0.0
  %v171 = vsel %vm149, %v35, 0.0
  %v172 = vsel %vm148, %v36, 0.0
  %v173 = vsel %vm149, %v37, 0.0
  %v174 = vsel %vm148, %v38, 0.0
  %v175 = vsel %vm149, %v39, 0.0
  %v176 = vsel %vm148, %v40, 0.0
  %v177 = vsel %vm149, %v41, 0.0
  %v178 = vsel %vm148, %v42, 0.0
  %v179 = vsel %vm149, %v43, 0.0
  %v180 = vsel %vm148, %v44, 0.0
  %v181 = vsel %vm149, %v45, 0.0
  %v182 = vsel %vm148, %v46, 0.0
  %v183 = vsel %vm149, %v47, 0.0
  %v184 = vsel %vm148, %v48, 0.0
  %v185 = vsel %vm149, %v49, 0.0
  %v186 = vsel %vm148, %v50, 0.0
  %v187 = vsel %vm149, %v51, 0.0
  %v188 = vsel %vm148, %v52, 0.0
  %v189 = vsel %vm149, %v53, 0.0
  %v190 = vsel %vm148, %v54, 0.0
  %v191 = vsel %vm149, %v55, 0.0
  %v192 = vsel %vm148, %v56, 0.0
  %v193 = vsel %vm149, %v57, 0.0
  %v194 = vsel %vm148, %v58, 0.0
  %v195 = vsel %vm149, %v59, 0.0
  %v196 = vsel %vm148, %v60, 0.0
  %v197 = vsel %vm149, %v61, 0.0
  %v198 = vsel %vm148, %v62, 0.0
  %v199 = vsel %vm149, %v63, 0.0
  %v200 = vsel %vm148, %v64, 0.0
  %v201 = vsel %vm149, %v65, 0.0
  %v202 = vsel %vm148, %v66, 0.0
  %v203 = vsel %vm149, %v67, 0.0
  %v204 = vsel %vm148, %v68, 0.0
  %v205 = vsel %vm149, %v69, 0.0
  %v206 = vsel %vm148, %v70, 0.0
  %v207 = vsel %vm149, %v71, 0.0
  %v208 = vsel %vm148, %v72, 0.0
  %v209 = vsel %vm149, %v73, 0.0
  %v210 = vsel %vm148, %v74, 0.0
  %v211 = vsel %vm149, %v75, 0.0
  %v212 = vsel %vm148, %v76, 0.0
  %v213 = vsel %vm149, %v77, 0.0
  %v214 = vsel %vm148, %v78, 0.0
  %v215 = vsel %vm149, %v79, 0.0
  %v216 = vsel %vm148, %v80, 0.0
  %v217 = vsel %vm149, %v81, 0.0
  %v218 = vsel %vm148, %v82, 0.0
  %v219 = vsel %vm149, %v83, 0.0
  %v220 = vsel %vm148, %v84, 0.0
  %v221 = vsel %vm149, %v85, 0.0
  %v222 = vsel %vm148, %v86, 0.0
  %v223 = vsel %vm149, %v87, 0.0
  %v224 = vsel %vm148, %v88, 0.0
  %v225 = vsel %vm149, %v89, 0.0
  %v226 = vsel %vm148, %v90, 0.0
  %v227 = vsel %vm149, %v91, 0.0
  %v228 = vsel %vm148, %v92, 0.0
  %v229 = vsel %vm149, %v93, 0.0
  %v230 = vsel %vm148, %v94, 0.0
  %v231 = vsel %vm149, %v95, 0.0
  %v232 = vsel %vm148, %v96, 0.0
  %v233 = vsel %vm149, %v97, 0.0
  %v234 = vsel %vm148, %v98, 0.0
  %v235 = vsel %vm149, %v99, 0.0
  %v236 = vsel %vm148, %v100, 0.0
  %v237 = vsel %vm149, %v101, 0.0
  %v238 = vsel %vm148, %v102, 0.0
  %v239 = vsel %vm149, %v103, 0.0
  %v240 = vsel %vm148, %v104, 0.0
  %v241 = vsel %vm149, %v105, 0.0
  %v242 = vsel %vm148, %v106, 0.0
  %v243 = vsel %vm149, %v107, 0.0
  %v244 = vsel %vm148, %v108, 0.0
  %v245 = vsel %vm149, %v109, 0.0
  %v246 = vsel %vm148, %v110, 0.0
  %v247 = vsel %vm149, %v111, 0.0
  %v248 = vsel %vm148, %v112, 0.0
  %v249 = vsel %vm149, %v113, 0.0
  %v250 = vsel %vm148, %v114, 0.0
  %v251 = vsel %vm149, %v115, 0.0
  %v252 = vsel %vm148, %v116, 0.0
  %v253 = vsel %vm149, %v117, 0.0
  %v254 = vsel %vm148, %v118, 0.0
  %v255 = vsel %vm149, %v119, 0.0
  %v256 = vsel %vm148, %v120, 0.0
  %v257 = vsel %vm149, %v121, 0.0
  %v258 = vsel %vm148, %v122, 0.0
  %v259 = vsel %vm149, %v123, 0.0
  %v260 = vsel %vm148, %v124, 0.0
  %v261 = vsel %vm149, %v125, 0.0
  %v262 = vsel %vm148, %v126, 0.0
  %v263 = vsel %vm149, %v127, 0.0
  %v264 = vsel %vm148, %v128, 0.0
  %v265 = vsel %vm149, %v129, 0.0
  %v266 = vsel %vm148, %v130, 0.0
  %v267 = vsel %vm149, %v131, 0.0
  %v268 = vsel %vm148, %v132, 0.0
  %v269 = vsel %vm149, %v133, 0.0
  %v270 = vsel %vm148, %v134, 0.0
  %v271 = vsel %vm149, %v135, 0.0
  %v272 = vsel %vm148, %v136, 0.0
  %v273 = vsel %vm149, %v137, 0.0
  %v274 = vsel %vm148, %v138, 0.0
  %v275 = vsel %vm149, %v139, 0.0
  %v276 = vsel %vm148, %v140, 0.0
  %v277 = vsel %vm149, %v141, 0.0
  %v278 = vadd.f32 %v150, %v152
  %v279 = vadd.f32 %v278, %v154
  %v280 = vadd.f32 %v279, %v156
  %v281 = vadd.f32 %v280, %v158
  %v282 = vadd.f32 %v281, %v160
  %v283 = vadd.f32 %v282, %v162
  %v284 = vadd.f32 %v283, %v164
  %v285 = vadd.f32 %v284, %v166
  %v286 = vadd.f32 %v285, %v168
  %v287 = vadd.f32 %v286, %v170
  %v288 = vadd.f32 %v287, %v172
  %v289 = vadd.f32 %v288, %v174
  %v290 = vadd.f32 %v289, %v176
  %v291 = vadd.f32 %v290, %v178
  %v292 = vadd.f32 %v291, %v180
  %v293 = vadd.f32 %v292, %v182
  %v294 = vadd.f32 %v293, %v184
  %v295 = vadd.f32 %v294, %v186
  %v296 = vadd.f32 %v295, %v188
  %v297 = vadd.f32 %v296, %v190
  %v298 = vadd.f32 %v297, %v192
  %v299 = vadd.f32 %v298, %v194
  %v300 = vadd.f32 %v299, %v196
  %v301 = vadd.f32 %v300, %v198
  %v302 = vadd.f32 %v301, %v200
  %v303 = vadd.f32 %v302, %v202
  %v304 = vadd.f32 %v303, %v204
  %v305 = vadd.f32 %v304, %v206
  %v306 = vadd.f32 %v305, %v208
  %v307 = vadd.f32 %v306, %v210
  %v308 = vadd.f32 %v307, %v212
  %v309 = vadd.f32 %v308, %v214
  %v310 = vadd.f32 %v309, %v216
  %v311 = vadd.f32 %v310, %v218
  %v312 = vadd.f32 %v311, %v220
  %v313 = vadd.f32 %v312, %v222
  %v314 = vadd.f32 %v313, %v224
  %v315 = vadd.f32 %v314, %v226
  %v316 = vadd.f32 %v315, %v228
  %v317 = vadd.f32 %v316, %v230
  %v318 = vadd.f32 %v317, %v232
  %v319 = vadd.f32 %v318, %v234
  %v320 = vadd.f32 %v319, %v236
  %v321 = vadd.f32 %v320, %v238
  %v322 = vadd.f32 %v321, %v240
  %v323 = vadd.f32 %v322, %v242
  %v324 = vadd.f32 %v323, %v244
  %v325 = vadd.f32 %v324, %v246
  %v326 = vadd.f32 %v325, %v248
  %v327 = vadd.f32 %v326, %v250
  %v328 = vadd.f32 %v327, %v252
  %v329 = vadd.f32 %v328, %v254
  %v330 = vadd.f32 %v329, %v256
  %v331 = vadd.f32 %v330, %v258
  %v332 = vadd.f32 %v331, %v260
  %v333 = vadd.f32 %v332, %v262
  %v334 = vadd.f32 %v333, %v264
  %v335 = vadd.f32 %v334, %v266
  %v336 = vadd.f32 %v335, %v268
  %v337 = vadd.f32 %v336, %v270
  %v338 = vadd.f32 %v337, %v272
  %v339 = vadd.f32 %v338, %v274
  %v340 = vadd.f32 %v339, %v276
  %v341 = vrot.slane %v340, 4
  %v342 = vadd.f32 %v340, %v341
  %v343 = vrot.slane %v342, 2
  %v344 = vadd.f32 %v342, %v343
  %v345 = vrot.slane %v344, 1
  %v346 = vadd.f32 %v344, %v345
  %v347 = vadd.f32 %v151, %v153
  %v348 = vadd.f32 %v347, %v155
  %v349 = vadd.f32 %v348, %v157
  %v350 = vadd.f32 %v349, %v159
  %v351 = vadd.f32 %v350, %v161
  %v352 = vadd.f32 %v351, %v163
  %v353 = vadd.f32 %v352, %v165
  %v354 = vadd.f32 %v353, %v167
  %v355 = vadd.f32 %v354, %v169
  %v356 = vadd.f32 %v355, %v171
  %v357 = vadd.f32 %v356, %v173
  %v358 = vadd.f32 %v357, %v175
  %v359 = vadd.f32 %v358, %v177
  %v360 = vadd.f32 %v359, %v179
  %v361 = vadd.f32 %v360, %v181
  %v362 = vadd.f32 %v361, %v183
  %v363 = vadd.f32 %v362, %v185
  %v364 = vadd.f32 %v363, %v187
  %v365 = vadd.f32 %v364, %v189
  %v366 = vadd.f32 %v365, %v191
  %v367 = vadd.f32 %v366, %v193
  %v368 = vadd.f32 %v367, %v195
  %v369 = vadd.f32 %v368, %v197
  %v370 = vadd.f32 %v369, %v199
  %v371 = vadd.f32 %v370, %v201
  %v372 = vadd.f32 %v371, %v203
  %v373 = vadd.f32 %v372, %v205
  %v374 = vadd.f32 %v373, %v207
  %v375 = vadd.f32 %v374, %v209
  %v376 = vadd.f32 %v375, %v211
  %v377 = vadd.f32 %v376, %v213
  %v378 = vadd.f32 %v377, %v215
  %v379 = vadd.f32 %v378, %v217
  %v380 = vadd.f32 %v379, %v219
  %v381 = vadd.f32 %v380, %v221
  %v382 = vadd.f32 %v381, %v223
  %v383 = vadd.f32 %v382, %v225
  %v384 = vadd.f32 %v383, %v227
  %v385 = vadd.f32 %v384, %v229
  %v386 = vadd.f32 %v385, %v231
  %v387 = vadd.f32 %v386, %v233
  %v388 = vadd.f32 %v387, %v235
  %v389 = vadd.f32 %v388, %v237
  %v390 = vadd.f32 %v389, %v239
  %v391 = vadd.f32 %v390, %v241
  %v392 = vadd.f32 %v391, %v243
  %v393 = vadd.f32 %v392, %v245
  %v394 = vadd.f32 %v393, %v247
  %v395 = vadd.f32 %v394, %v249
  %v396 = vadd.f32 %v395, %v251
  %v397 = vadd.f32 %v396, %v253
  %v398 = vadd.f32 %v397, %v255
  %v399 = vadd.f32 %v398, %v257
  %v400 = vadd.f32 %v399, %v259
  %v401 = vadd.f32 %v400, %v261
  %v402 = vadd.f32 %v401, %v263
  %v403 = vadd.f32 %v402, %v265
  %v404 = vadd.f32 %v403, %v267
  %v405 = vadd.f32 %v404, %v269
  %v406 = vadd.f32 %v405, %v271
  %v407 = vadd.f32 %v406, %v273
  %v408 = vadd.f32 %v407, %v275
  %v409 = vadd.f32 %v408, %v277
  %v410 = vrot.slane %v409, 4
  %v411 = vadd.f32 %v409, %v410
  %v412 = vrot.slane %v411, 2
  %v413 = vadd.f32 %v411, %v412
  %v414 = vrot.slane %v413, 1
  %v415 = vadd.f32 %v413, %v414
  %v416 = vmul.f32 %v346, 0.001953125
  %v417 = vmul.f32 %v415, 0.001953125
  %v418 = vsub.f32 %v150, %v416
  %v419 = vsub.f32 %v151, %v417
  %v420 = vsub.f32 %v152, %v416
  %v421 = vsub.f32 %v153, %v417
  %v422 = vsub.f32 %v154, %v416
  %v423 = vsub.f32 %v155, %v417
  %v424 = vsub.f32 %v156, %v416
  %v425 = vsub.f32 %v157, %v417
  %v426 = vsub.f32 %v158, %v416
  %v427 = vsub.f32 %v159, %v417
  %v428 = vsub.f32 %v160, %v416
  %v429 = vsub.f32 %v161, %v417
  %v430 = vsub.f32 %v162, %v416
  %v431 = vsub.f32 %v163, %v417
  %v432 = vsub.f32 %v164, %v416
  %v433 = vsub.f32 %v165, %v417
  %v434 = vsub.f32 %v166, %v416
  %v435 = vsub.f32 %v167, %v417
  %v436 = vsub.f32 %v168, %v416
  %v437 = vsub.f32 %v169, %v417
  %v438 = vsub.f32 %v170, %v416
  %v439 = vsub.f32 %v171, %v417
  %v440 = vsub.f32 %v172, %v416
  %v441 = vsub.f32 %v173, %v417
  %v442 = vsub.f32 %v174, %v416
  %v443 = vsub.f32 %v175, %v417
  %v444 = vsub.f32 %v176, %v416
  %v445 = vsub.f32 %v177, %v417
  %v446 = vsub.f32 %v178, %v416
  %v447 = vsub.f32 %v179, %v417
  %v448 = vsub.f32 %v180, %v416
  %v449 = vsub.f32 %v181, %v417
  %v450 = vsub.f32 %v182, %v416
  %v451 = vsub.f32 %v183, %v417
  %v452 = vsub.f32 %v184, %v416
  %v453 = vsub.f32 %v185, %v417
  %v454 = vsub.f32 %v186, %v416
  %v455 = vsub.f32 %v187, %v417
  %v456 = vsub.f32 %v188, %v416
  %v457 = vsub.f32 %v189, %v417
  %v458 = vsub.f32 %v190, %v416
  %v459 = vsub.f32 %v191, %v417
  %v460 = vsub.f32 %v192, %v416
  %v461 = vsub.f32 %v193, %v417
  %v462 = vsub.f32 %v194, %v416
  %v463 = vsub.f32 %v195, %v417
  %v464 = vsub.f32 %v196, %v416
  %v465 = vsub.f32 %v197, %v417
  %v466 = vsub.f32 %v198, %v416
  %v467 = vsub.f32 %v199, %v417
  %v468 = vsub.f32 %v200, %v416
  %v469 = vsub.f32 %v201, %v417
  %v470 = vsub.f32 %v202, %v416
  %v471 = vsub.f32 %v203, %v417
  %v472 = vsub.f32 %v204, %v416
  %v473 = vsub.f32 %v205, %v417
  %v474 = vsub.f32 %v206, %v416
  %v475 = vsub.f32 %v207, %v417
  %v476 = vsub.f32 %v208, %v416
  %v477 = vsub.f32 %v209, %v417
  %v478 = vsub.f32 %v210, %v416
  %v479 = vsub.f32 %v211, %v417
  %v480 = vsub.f32 %v212, %v416
  %v481 = vsub.f32 %v213, %v417
  %v482 = vsub.f32 %v214, %v416
  %v483 = vsub.f32 %v215, %v417
  %v484 = vsub.f32 %v216, %v416
  %v485 = vsub.f32 %v217, %v417
  %v486 = vsub.f32 %v218, %v416
  %v487 = vsub.f32 %v219, %v417
  %v488 = vsub.f32 %v220, %v416
  %v489 = vsub.f32 %v221, %v417
  %v490 = vsub.f32 %v222, %v416
  %v491 = vsub.f32 %v223, %v417
  %v492 = vsub.f32 %v224, %v416
  %v493 = vsub.f32 %v225, %v417
  %v494 = vsub.f32 %v226, %v416
  %v495 = vsub.f32 %v227, %v417
  %v496 = vsub.f32 %v228, %v416
  %v497 = vsub.f32 %v229, %v417
  %v498 = vsub.f32 %v230, %v416
  %v499 = vsub.f32 %v231, %v417
  %v500 = vsub.f32 %v232, %v416
  %v501 = vsub.f32 %v233, %v417
  %v502 = vsub.f32 %v234, %v416
  %v503 = vsub.f32 %v235, %v417
  %v504 = vsub.f32 %v236, %v416
  %v505 = vsub.f32 %v237, %v417
  %v506 = vsub.f32 %v238, %v416
  %v507 = vsub.f32 %v239, %v417
  %v508 = vsub.f32 %v240, %v416
  %v509 = vsub.f32 %v241, %v417
  %v510 = vsub.f32 %v242, %v416
  %v511 = vsub.f32 %v243, %v417
  %v512 = vsub.f32 %v244, %v416
  %v513 = vsub.f32 %v245, %v417
  %v514 = vsub.f32 %v246, %v416
  %v515 = vsub.f32 %v247, %v417
  %v516 = vsub.f32 %v248, %v416
  %v517 = vsub.f32 %v249, %v417
  %v518 = vsub.f32 %v250, %v416
  %v519 = vsub.f32 %v251, %v417
  %v520 = vsub.f32 %v252, %v416
  %v521 = vsub.f32 %v253, %v417
  %v522 = vsub.f32 %v254, %v416
  %v523 = vsub.f32 %v255, %v417
  %v524 = vsub.f32 %v256, %v416
  %v525 = vsub.f32 %v257, %v417
  %v526 = vsub.f32 %v258, %v416
  %v527 = vsub.f32 %v259, %v417
  %v528 = vsub.f32 %v260, %v416
  %v529 = vsub.f32 %v261, %v417
  %v530 = vsub.f32 %v262, %v416
  %v531 = vsub.f32 %v263, %v417
  %v532 = vsub.f32 %v264, %v416
  %v533 = vsub.f32 %v265, %v417
  %v534 = vsub.f32 %v266, %v416
  %v535 = vsub.f32 %v267, %v417
  %v536 = vsub.f32 %v268, %v416
  %v537 = vsub.f32 %v269, %v417
  %v538 = vsub.f32 %v270, %v416
  %v539 = vsub.f32 %v271, %v417
  %v540 = vsub.f32 %v272, %v416
  %v541 = vsub.f32 %v273, %v417
  %v542 = vsub.f32 %v274, %v416
  %v543 = vsub.f32 %v275, %v417
  %v544 = vsub.f32 %v276, %v416
  %v545 = vsub.f32 %v277, %v417
  %v546 = vsel %vm148, %v418, 0.0
  %v547 = vsel %vm149, %v419, 0.0
  %v548 = vsel %vm148, %v420, 0.0
  %v549 = vsel %vm149, %v421, 0.0
  %v550 = vsel %vm148, %v422, 0.0
  %v551 = vsel %vm149, %v423, 0.0
  %v552 = vsel %vm148, %v424, 0.0
  %v553 = vsel %vm149, %v425, 0.0
  %v554 = vsel %vm148, %v426, 0.0
  %v555 = vsel %vm149, %v427, 0.0
  %v556 = vsel %vm148, %v428, 0.0
  %v557 = vsel %vm149, %v429, 0.0
  %v558 = vsel %vm148, %v430, 0.0
  %v559 = vsel %vm149, %v431, 0.0
  %v560 = vsel %vm148, %v432, 0.0
  %v561 = vsel %vm149, %v433, 0.0
  %v562 = vsel %vm148, %v434, 0.0
  %v563 = vsel %vm149, %v435, 0.0
  %v564 = vsel %vm148, %v436, 0.0
  %v565 = vsel %vm149, %v437, 0.0
  %v566 = vsel %vm148, %v438, 0.0
  %v567 = vsel %vm149, %v439, 0.0
  %v568 = vsel %vm148, %v440, 0.0
  %v569 = vsel %vm149, %v441, 0.0
  %v570 = vsel %vm148, %v442, 0.0
  %v571 = vsel %vm149, %v443, 0.0
  %v572 = vsel %vm148, %v444, 0.0
  %v573 = vsel %vm149, %v445, 0.0
  %v574 = vsel %vm148, %v446, 0.0
  %v575 = vsel %vm149, %v447, 0.0
  %v576 = vsel %vm148, %v448, 0.0
  %v577 = vsel %vm149, %v449, 0.0
  %v578 = vsel %vm148, %v450, 0.0
  %v579 = vsel %vm149, %v451, 0.0
  %v580 = vsel %vm148, %v452, 0.0
  %v581 = vsel %vm149, %v453, 0.0
  %v582 = vsel %vm148, %v454, 0.0
  %v583 = vsel %vm149, %v455, 0.0
  %v584 = vsel %vm148, %v456, 0.0
  %v585 = vsel %vm149, %v457, 0.0
  %v586 = vsel %vm148, %v458, 0.0
  %v587 = vsel %vm149, %v459, 0.0
  %v588 = vsel %vm148, %v460, 0.0
  %v589 = vsel %vm149, %v461, 0.0
  %v590 = vsel %vm148, %v462, 0.0
  %v591 = vsel %vm149, %v463, 0.0
  %v592 = vsel %vm148, %v464, 0.0
  %v593 = vsel %vm149, %v465, 0.0
  %v594 = vsel %vm148, %v466, 0.0
  %v595 = vsel %vm149, %v467, 0.0
  %v596 = vsel %vm148, %v468, 0.0
  %v597 = vsel %vm149, %v469, 0.0
  %v598 = vsel %vm148, %v470, 0.0
  %v599 = vsel %vm149, %v471, 0.0
  %v600 = vsel %vm148, %v472, 0.0
  %v601 = vsel %vm149, %v473, 0.0
  %v602 = vsel %vm148, %v474, 0.0
  %v603 = vsel %vm149, %v475, 0.0
  %v604 = vsel %vm148, %v476, 0.0
  %v605 = vsel %vm149, %v477, 0.0
  %v606 = vsel %vm148, %v478, 0.0
  %v607 = vsel %vm149, %v479, 0.0
  %v608 = vsel %vm148, %v480, 0.0
  %v609 = vsel %vm149, %v481, 0.0
  %v610 = vsel %vm148, %v482, 0.0
  %v611 = vsel %vm149, %v483, 0.0
  %v612 = vsel %vm148, %v484, 0.0
  %v613 = vsel %vm149, %v485, 0.0
  %v614 = vsel %vm148, %v486, 0.0
  %v615 = vsel %vm149, %v487, 0.0
  %v616 = vsel %vm148, %v488, 0.0
  %v617 = vsel %vm149, %v489, 0.0
  %v618 = vsel %vm148, %v490, 0.0
  %v619 = vsel %vm149, %v491, 0.0
  %v620 = vsel %vm148, %v492, 0.0
  %v621 = vsel %vm149, %v493, 0.0
  %v622 = vsel %vm148, %v494, 0.0
  %v623 = vsel %vm149, %v495, 0.0
  %v624 = vsel %vm148, %v496, 0.0
  %v625 = vsel %vm149, %v497, 0.0
  %v626 = vsel %vm148, %v498, 0.0
  %v627 = vsel %vm149, %v499, 0.0
  %v628 = vsel %vm148, %v500, 0.0
  %v629 = vsel %vm149, %v501, 0.0
  %v630 = vsel %vm148, %v502, 0.0
  %v631 = vsel %vm149, %v503, 0.0
  %v632 = vsel %vm148, %v504, 0.0
  %v633 = vsel %vm149, %v505, 0.0
  %v634 = vsel %vm148, %v506, 0.0
  %v635 = vsel %vm149, %v507, 0.0
  %v636 = vsel %vm148, %v508, 0.0
  %v637 = vsel %vm149, %v509, 0.0
  %v638 = vsel %vm148, %v510, 0.0
  %v639 = vsel %vm149, %v511, 0.0
  %v640 = vsel %vm148, %v512, 0.0
  %v641 = vsel %vm149, %v513, 0.0
  %v642 = vsel %vm148, %v514, 0.0
  %v643 = vsel %vm149, %v515, 0.0
  %v644 = vsel %vm148, %v516, 0.0
  %v645 = vsel %vm149, %v517, 0.0
  %v646 = vsel %vm148, %v518, 0.0
  %v647 = vsel %vm149, %v519, 0.0
  %v648 = vsel %vm148, %v520, 0.0
  %v649 = vsel %vm149, %v521, 0.0
  %v650 = vsel %vm148, %v522, 0.0
  %v651 = vsel %vm149, %v523, 0.0
  %v652 = vsel %vm148, %v524, 0.0
  %v653 = vsel %vm149, %v525, 0.0
  %v654 = vsel %vm148, %v526, 0.0
  %v655 = vsel %vm149, %v527, 0.0
  %v656 = vsel %vm148, %v528, 0.0
  %v657 = vsel %vm149, %v529, 0.0
  %v658 = vsel %vm148, %v530, 0.0
  %v659 = vsel %vm149, %v531, 0.0
  %v660 = vsel %vm148, %v532, 0.0
  %v661 = vsel %vm149, %v533, 0.0
  %v662 = vsel %vm148, %v534, 0.0
  %v663 = vsel %vm149, %v535, 0.0
  %v664 = vsel %vm148, %v536, 0.0
  %v665 = vsel %vm149, %v537, 0.0
  %v666 = vsel %vm148, %v538, 0.0
  %v667 = vsel %vm149, %v539, 0.0
  %v668 = vsel %vm148, %v540, 0.0
  %v669 = vsel %vm149, %v541, 0.0
  %v670 = vsel %vm148, %v542, 0.0
  %v671 = vsel %vm149, %v543, 0.0
  %v672 = vsel %vm148, %v544, 0.0
  %v673 = vsel %vm149, %v545, 0.0
  %v674 = vmul.f32 %v546, %v546
  %v675 = vmul.f32 %v547, %v547
  %v676 = vmul.f32 %v548, %v548
  %v677 = vmul.f32 %v549, %v549
  %v678 = vmul.f32 %v550, %v550
  %v679 = vmul.f32 %v551, %v551
  %v680 = vmul.f32 %v552, %v552
  %v681 = vmul.f32 %v553, %v553
  %v682 = vmul.f32 %v554, %v554
  %v683 = vmul.f32 %v555, %v555
  %v684 = vmul.f32 %v556, %v556
  %v685 = vmul.f32 %v557, %v557
  %v686 = vmul.f32 %v558, %v558
  %v687 = vmul.f32 %v559, %v559
  %v688 = vmul.f32 %v560, %v560
  %v689 = vmul.f32 %v561, %v561
  %v690 = vmul.f32 %v562, %v562
  %v691 = vmul.f32 %v563, %v563
  %v692 = vmul.f32 %v564, %v564
  %v693 = vmul.f32 %v565, %v565
  %v694 = vmul.f32 %v566, %v566
  %v695 = vmul.f32 %v567, %v567
  %v696 = vmul.f32 %v568, %v568
  %v697 = vmul.f32 %v569, %v569
  %v698 = vmul.f32 %v570, %v570
  %v699 = vmul.f32 %v571, %v571
  %v700 = vmul.f32 %v572, %v572
  %v701 = vmul.f32 %v573, %v573
  %v702 = vmul.f32 %v574, %v574
  %v703 = vmul.f32 %v575, %v575
  %v704 = vmul.f32 %v576, %v576
  %v705 = vmul.f32 %v577, %v577
  %v706 = vmul.f32 %v578, %v578
  %v707 = vmul.f32 %v579, %v579
  %v708 = vmul.f32 %v580, %v580
  %v709 = vmul.f32 %v581, %v581
  %v710 = vmul.f32 %v582, %v582
  %v711 = vmul.f32 %v583, %v583
  %v712 = vmul.f32 %v584, %v584
  %v713 = vmul.f32 %v585, %v585
  %v714 = vmul.f32 %v586, %v586
  %v715 = vmul.f32 %v587, %v587
  %v716 = vmul.f32 %v588, %v588
  %v717 = vmul.f32 %v589, %v589
  %v718 = vmul.f32 %v590, %v590
  %v719 = vmul.f32 %v591, %v591
  %v720 = vmul.f32 %v592, %v592
  %v721 = vmul.f32 %v593, %v593
  %v722 = vmul.f32 %v594, %v594
  %v723 = vmul.f32 %v595, %v595
  %v724 = vmul.f32 %v596, %v596
  %v725 = vmul.f32 %v597, %v597
  %v726 = vmul.f32 %v598, %v598
  %v727 = vmul.f32 %v599, %v599
  %v728 = vmul.f32 %v600, %v600
  %v729 = vmul.f32 %v601, %v601
  %v730 = vmul.f32 %v602, %v602
  %v731 = vmul.f32 %v603, %v603
  %v732 = vmul.f32 %v604, %v604
  %v733 = vmul.f32 %v605, %v605
  %v734 = vmul.f32 %v606, %v606
  %v735 = vmul.f32 %v607, %v607
  %v736 = vmul.f32 %v608, %v608
  %v737 = vmul.f32 %v609, %v609
  %v738 = vmul.f32 %v610, %v610
  %v739 = vmul.f32 %v611, %v611
  %v740 = vmul.f32 %v612, %v612
  %v741 = vmul.f32 %v613, %v613
  %v742 = vmul.f32 %v614, %v614
  %v743 = vmul.f32 %v615, %v615
  %v744 = vmul.f32 %v616, %v616
  %v745 = vmul.f32 %v617, %v617
  %v746 = vmul.f32 %v618, %v618
  %v747 = vmul.f32 %v619, %v619
  %v748 = vmul.f32 %v620, %v620
  %v749 = vmul.f32 %v621, %v621
  %v750 = vmul.f32 %v622, %v622
  %v751 = vmul.f32 %v623, %v623
  %v752 = vmul.f32 %v624, %v624
  %v753 = vmul.f32 %v625, %v625
  %v754 = vmul.f32 %v626, %v626
  %v755 = vmul.f32 %v627, %v627
  %v756 = vmul.f32 %v628, %v628
  %v757 = vmul.f32 %v629, %v629
  %v758 = vmul.f32 %v630, %v630
  %v759 = vmul.f32 %v631, %v631
  %v760 = vmul.f32 %v632, %v632
  %v761 = vmul.f32 %v633, %v633
  %v762 = vmul.f32 %v634, %v634
  %v763 = vmul.f32 %v635, %v635
  %v764 = vmul.f32 %v636, %v636
  %v765 = vmul.f32 %v637, %v637
  %v766 = vmul.f32 %v638, %v638
  %v767 = vmul.f32 %v639, %v639
  %v768 = vmul.f32 %v640, %v640
  %v769 = vmul.f32 %v641, %v641
  %v770 = vmul.f32 %v642, %v642
  %v771 = vmul.f32 %v643, %v643
  %v772 = vmul.f32 %v644, %v644
  %v773 = vmul.f32 %v645, %v645
  %v774 = vmul.f32 %v646, %v646
  %v775 = vmul.f32 %v647, %v647
  %v776 = vmul.f32 %v648, %v648
  %v777 = vmul.f32 %v649, %v649
  %v778 = vmul.f32 %v650, %v650
  %v779 = vmul.f32 %v651, %v651
  %v780 = vmul.f32 %v652, %v652
  %v781 = vmul.f32 %v653, %v653
  %v782 = vmul.f32 %v654, %v654
  %v783 = vmul.f32 %v655, %v655
  %v784 = vmul.f32 %v656, %v656
  %v785 = vmul.f32 %v657, %v657
  %v786 = vmul.f32 %v658, %v658
  %v787 = vmul.f32 %v659, %v659
  %v788 = vmul.f32 %v660, %v660
  %v789 = vmul.f32 %v661, %v661
  %v790 = vmul.f32 %v662, %v662
  %v791 = vmul.f32 %v663, %v663
  %v792 = vmul.f32 %v664, %v664
  %v793 = vmul.f32 %v665, %v665
  %v794 = vmul.f32 %v666, %v666
  %v795 = vmul.f32 %v667, %v667
  %v796 = vmul.f32 %v668, %v668
  %v797 = vmul.f32 %v669, %v669
  %v798 = vmul.f32 %v670, %v670
  %v799 = vmul.f32 %v671, %v671
  %v800 = vmul.f32 %v672, %v672
  %v801 = vmul.f32 %v673, %v673
  %v802 = vadd.f32 %v674, %v676
  %v803 = vadd.f32 %v802, %v678
  %v804 = vadd.f32 %v803, %v680
  %v805 = vadd.f32 %v804, %v682
  %v806 = vadd.f32 %v805, %v684
  %v807 = vadd.f32 %v806, %v686
  %v808 = vadd.f32 %v807, %v688
  %v809 = vadd.f32 %v808, %v690
  %v810 = vadd.f32 %v809, %v692
  %v811 = vadd.f32 %v810, %v694
  %v812 = vadd.f32 %v811, %v696
  %v813 = vadd.f32 %v812, %v698
  %v814 = vadd.f32 %v813, %v700
  %v815 = vadd.f32 %v814, %v702
  %v816 = vadd.f32 %v815, %v704
  %v817 = vadd.f32 %v816, %v706
  %v818 = vadd.f32 %v817, %v708
  %v819 = vadd.f32 %v818, %v710
  %v820 = vadd.f32 %v819, %v712
  %v821 = vadd.f32 %v820, %v714
  %v822 = vadd.f32 %v821, %v716
  %v823 = vadd.f32 %v822, %v718
  %v824 = vadd.f32 %v823, %v720
  %v825 = vadd.f32 %v824, %v722
  %v826 = vadd.f32 %v825, %v724
  %v827 = vadd.f32 %v826, %v726
  %v828 = vadd.f32 %v827, %v728
  %v829 = vadd.f32 %v828, %v730
  %v830 = vadd.f32 %v829, %v732
  %v831 = vadd.f32 %v830, %v734
  %v832 = vadd.f32 %v831, %v736
  %v833 = vadd.f32 %v832, %v738
  %v834 = vadd.f32 %v833, %v740
  %v835 = vadd.f32 %v834, %v742
  %v836 = vadd.f32 %v835, %v744
  %v837 = vadd.f32 %v836, %v746
  %v838 = vadd.f32 %v837, %v748
  %v839 = vadd.f32 %v838, %v750
  %v840 = vadd.f32 %v839, %v752
  %v841 = vadd.f32 %v840, %v754
  %v842 = vadd.f32 %v841, %v756
  %v843 = vadd.f32 %v842, %v758
  %v844 = vadd.f32 %v843, %v760
  %v845 = vadd.f32 %v844, %v762
  %v846 = vadd.f32 %v845, %v764
  %v847 = vadd.f32 %v846, %v766
  %v848 = vadd.f32 %v847, %v768
  %v849 = vadd.f32 %v848, %v770
  %v850 = vadd.f32 %v849, %v772
  %v851 = vadd.f32 %v850, %v774
  %v852 = vadd.f32 %v851, %v776
  %v853 = vadd.f32 %v852, %v778
  %v854 = vadd.f32 %v853, %v780
  %v855 = vadd.f32 %v854, %v782
  %v856 = vadd.f32 %v855, %v784
  %v857 = vadd.f32 %v856, %v786
  %v858 = vadd.f32 %v857, %v788
  %v859 = vadd.f32 %v858, %v790
  %v860 = vadd.f32 %v859, %v792
  %v861 = vadd.f32 %v860, %v794
  %v862 = vadd.f32 %v861, %v796
  %v863 = vadd.f32 %v862, %v798
  %v864 = vadd.f32 %v863, %v800
  %v865 = vrot.slane %v864, 4
  %v866 = vadd.f32 %v864, %v865
  %v867 = vrot.slane %v866, 2
  %v868 = vadd.f32 %v866, %v867
  %v869 = vrot.slane %v868, 1
  %v870 = vadd.f32 %v868, %v869
  %v871 = vadd.f32 %v675, %v677
  %v872 = vadd.f32 %v871, %v679
  %v873 = vadd.f32 %v872, %v681
  %v874 = vadd.f32 %v873, %v683
  %v875 = vadd.f32 %v874, %v685
  %v876 = vadd.f32 %v875, %v687
  %v877 = vadd.f32 %v876, %v689
  %v878 = vadd.f32 %v877, %v691
  %v879 = vadd.f32 %v878, %v693
  %v880 = vadd.f32 %v879, %v695
  %v881 = vadd.f32 %v880, %v697
  %v882 = vadd.f32 %v881, %v699
  %v883 = vadd.f32 %v882, %v701
  %v884 = vadd.f32 %v883, %v703
  %v885 = vadd.f32 %v884, %v705
  %v886 = vadd.f32 %v885, %v707
  %v887 = vadd.f32 %v886, %v709
  %v888 = vadd.f32 %v887, %v711
  %v889 = vadd.f32 %v888, %v713
  %v890 = vadd.f32 %v889, %v715
  %v891 = vadd.f32 %v890, %v717
  %v892 = vadd.f32 %v891, %v719
  %v893 = vadd.f32 %v892, %v721
  %v894 = vadd.f32 %v893, %v723
  %v895 = vadd.f32 %v894, %v725
  %v896 = vadd.f32 %v895, %v727
  %v897 = vadd.f32 %v896, %v729
  %v898 = vadd.f32 %v897, %v731
  %v899 = vadd.f32 %v898, %v733
  %v900 = vadd.f32 %v899, %v735
  %v901 = vadd.f32 %v900, %v737
  %v902 = vadd.f32 %v901, %v739
  %v903 = vadd.f32 %v902, %v741
  %v904 = vadd.f32 %v903, %v743
  %v905 = vadd.f32 %v904, %v745
  %v906 = vadd.f32 %v905, %v747
  %v907 = vadd.f32 %v906, %v749
  %v908 = vadd.f32 %v907, %v751
  %v909 = vadd.f32 %v908, %v753
  %v910 = vadd.f32 %v909, %v755
  %v911 = vadd.f32 %v910, %v757
  %v912 = vadd.f32 %v911, %v759
  %v913 = vadd.f32 %v912, %v761
  %v914 = vadd.f32 %v913, %v763
  %v915 = vadd.f32 %v914, %v765
  %v916 = vadd.f32 %v915, %v767
  %v917 = vadd.f32 %v916, %v769
  %v918 = vadd.f32 %v917, %v771
  %v919 = vadd.f32 %v918, %v773
  %v920 = vadd.f32 %v919, %v775
  %v921 = vadd.f32 %v920, %v777
  %v922 = vadd.f32 %v921, %v779
  %v923 = vadd.f32 %v922, %v781
  %v924 = vadd.f32 %v923, %v783
  %v925 = vadd.f32 %v924, %v785
  %v926 = vadd.f32 %v925, %v787
  %v927 = vadd.f32 %v926, %v789
  %v928 = vadd.f32 %v927, %v791
  %v929 = vadd.f32 %v928, %v793
  %v930 = vadd.f32 %v929, %v795
  %v931 = vadd.f32 %v930, %v797
  %v932 = vadd.f32 %v931, %v799
  %v933 = vadd.f32 %v932, %v801
  %v934 = vrot.slane %v933, 4
  %v935 = vadd.f32 %v933, %v934
  %v936 = vrot.slane %v935, 2
  %v937 = vadd.f32 %v935, %v936
  %v938 = vrot.slane %v937, 1
  %v939 = vadd.f32 %v937, %v938
  %v940 = vmul.f32 %v870, 0.001953125
  %v941 = vmul.f32 %v939, 0.001953125
  %v942 = vadd.f32 %v940, 1e-05
  %v943 = vadd.f32 %v941, 1e-05
  %v944 = vrsqrt.pop %v942
  %v945 = vrsqrt.pop %v943
  %v946 = vld [vmem:[%s1] sm:$0x3]
  %v948 = vlaneseq
  %v949 = vshrl.u32 %v948, 7
  %v950 = vsub.s32 0, %v949
  %v951 = vrot.slane %v946, %v950
  %v952 = vlaneseq
  %v953 = vshrl.u32 %v952, 7
  %v954 = vsub.s32 1, %v953
  %v955 = vrot.slane %v946, %v954
  %v958 = vmul.f32 %v944, %v951
  %v959 = vmul.f32 %v945, %v955
  %v960 = vld [vmem:[%s2] sm:$0x3]
  %v961 = vmul.f32 %v416, %v958
  %v962 = vmul.f32 %v417, %v959
  %v965 = vcombine.low %v961, %v962
  %v967 = vunpack.c.l.s4 1966171168
  %v968 = vunpack.c.0.s8 %v967
  %v969 = vlaneseq
  %v970 = vshrl.u32 %v969, 7
  %v971 = vsub.s32 %v968, %v970
  %v972 = vrot.slane %v965, %v971
  %v974 = vunpack.c.l.s4 1966171168
  %v975 = vunpack.c.0.s8 %v974
  %v976 = vlaneseq
  %v977 = vshrl.u32 %v976, 7
  %v978 = vsub.s32 %v975, %v977
  %v979 = vrot.slane %v972, %v978
  %v981 = vsub.f32 %v960, %v979
  %v982 = vlaneseq
  %v983 = vshrl.u32 %v982, 7
  %v984 = vsub.s32 0, %v983
  %v985 = vrot.slane %v958, %v984
  %v986 = vlaneseq
  %v987 = vshrl.u32 %v986, 7
  %v988 = vsub.s32 0, %v987
  %v989 = vrot.slane %v959, %v988
  %v990 = vmul.f32 %v14, %v985
  %v991 = vmul.f32 %v15, %v989
  %v992 = vmul.f32 %v16, %v985
  %v993 = vmul.f32 %v17, %v989
  %v994 = vmul.f32 %v18, %v985
  %v995 = vmul.f32 %v19, %v989
  %v996 = vmul.f32 %v20, %v985
  %v997 = vmul.f32 %v21, %v989
  %v998 = vmul.f32 %v22, %v985
  %v999 = vmul.f32 %v23, %v989
  %v1000 = vmul.f32 %v24, %v985
  %v1001 = vmul.f32 %v25, %v989
  %v1002 = vmul.f32 %v26, %v985
  %v1003 = vmul.f32 %v27, %v989
  %v1004 = vmul.f32 %v28, %v985
  %v1005 = vmul.f32 %v29, %v989
  %v1006 = vmul.f32 %v30, %v985
  %v1007 = vmul.f32 %v31, %v989
  %v1008 = vmul.f32 %v32, %v985
  %v1009 = vmul.f32 %v33, %v989
  %v1010 = vmul.f32 %v34, %v985
  %v1011 = vmul.f32 %v35, %v989
  %v1012 = vmul.f32 %v36, %v985
  %v1013 = vmul.f32 %v37, %v989
  %v1014 = vmul.f32 %v38, %v985
  %v1015 = vmul.f32 %v39, %v989
  %v1016 = vmul.f32 %v40, %v985
  %v1017 = vmul.f32 %v41, %v989
  %v1018 = vmul.f32 %v42, %v985
  %v1019 = vmul.f32 %v43, %v989
  %v1020 = vmul.f32 %v44, %v985
  %v1021 = vmul.f32 %v45, %v989
  %v1022 = vmul.f32 %v46, %v985
  %v1023 = vmul.f32 %v47, %v989
  %v1024 = vmul.f32 %v48, %v985
  %v1025 = vmul.f32 %v49, %v989
  %v1026 = vmul.f32 %v50, %v985
  %v1027 = vmul.f32 %v51, %v989
  %v1028 = vmul.f32 %v52, %v985
  %v1029 = vmul.f32 %v53, %v989
  %v1030 = vmul.f32 %v54, %v985
  %v1031 = vmul.f32 %v55, %v989
  %v1032 = vmul.f32 %v56, %v985
  %v1033 = vmul.f32 %v57, %v989
  %v1034 = vmul.f32 %v58, %v985
  %v1035 = vmul.f32 %v59, %v989
  %v1036 = vmul.f32 %v60, %v985
  %v1037 = vmul.f32 %v61, %v989
  %v1038 = vmul.f32 %v62, %v985
  %v1039 = vmul.f32 %v63, %v989
  %v1040 = vmul.f32 %v64, %v985
  %v1041 = vmul.f32 %v65, %v989
  %v1042 = vmul.f32 %v66, %v985
  %v1043 = vmul.f32 %v67, %v989
  %v1044 = vmul.f32 %v68, %v985
  %v1045 = vmul.f32 %v69, %v989
  %v1046 = vmul.f32 %v70, %v985
  %v1047 = vmul.f32 %v71, %v989
  %v1048 = vmul.f32 %v72, %v985
  %v1049 = vmul.f32 %v73, %v989
  %v1050 = vmul.f32 %v74, %v985
  %v1051 = vmul.f32 %v75, %v989
  %v1052 = vmul.f32 %v76, %v985
  %v1053 = vmul.f32 %v77, %v989
  %v1054 = vmul.f32 %v78, %v985
  %v1055 = vmul.f32 %v79, %v989
  %v1056 = vmul.f32 %v80, %v985
  %v1057 = vmul.f32 %v81, %v989
  %v1058 = vmul.f32 %v82, %v985
  %v1059 = vmul.f32 %v83, %v989
  %v1060 = vmul.f32 %v84, %v985
  %v1061 = vmul.f32 %v85, %v989
  %v1062 = vmul.f32 %v86, %v985
  %v1063 = vmul.f32 %v87, %v989
  %v1064 = vmul.f32 %v88, %v985
  %v1065 = vmul.f32 %v89, %v989
  %v1066 = vmul.f32 %v90, %v985
  %v1067 = vmul.f32 %v91, %v989
  %v1068 = vmul.f32 %v92, %v985
  %v1069 = vmul.f32 %v93, %v989
  %v1070 = vmul.f32 %v94, %v985
  %v1071 = vmul.f32 %v95, %v989
  %v1072 = vmul.f32 %v96, %v985
  %v1073 = vmul.f32 %v97, %v989
  %v1074 = vmul.f32 %v98, %v985
  %v1075 = vmul.f32 %v99, %v989
  %v1076 = vmul.f32 %v100, %v985
  %v1077 = vmul.f32 %v101, %v989
  %v1078 = vmul.f32 %v102, %v985
  %v1079 = vmul.f32 %v103, %v989
  %v1080 = vmul.f32 %v104, %v985
  %v1081 = vmul.f32 %v105, %v989
  %v1082 = vmul.f32 %v106, %v985
  %v1083 = vmul.f32 %v107, %v989
  %v1084 = vmul.f32 %v108, %v985
  %v1085 = vmul.f32 %v109, %v989
  %v1086 = vmul.f32 %v110, %v985
  %v1087 = vmul.f32 %v111, %v989
  %v1088 = vmul.f32 %v112, %v985
  %v1089 = vmul.f32 %v113, %v989
  %v1090 = vmul.f32 %v114, %v985
  %v1091 = vmul.f32 %v115, %v989
  %v1092 = vmul.f32 %v116, %v985
  %v1093 = vmul.f32 %v117, %v989
  %v1094 = vmul.f32 %v118, %v985
  %v1095 = vmul.f32 %v119, %v989
  %v1096 = vmul.f32 %v120, %v985
  %v1097 = vmul.f32 %v121, %v989
  %v1098 = vmul.f32 %v122, %v985
  %v1099 = vmul.f32 %v123, %v989
  %v1100 = vmul.f32 %v124, %v985
  %v1101 = vmul.f32 %v125, %v989
  %v1102 = vmul.f32 %v126, %v985
  %v1103 = vmul.f32 %v127, %v989
  %v1104 = vmul.f32 %v128, %v985
  %v1105 = vmul.f32 %v129, %v989
  %v1106 = vmul.f32 %v130, %v985
  %v1107 = vmul.f32 %v131, %v989
  %v1108 = vmul.f32 %v132, %v985
  %v1109 = vmul.f32 %v133, %v989
  %v1110 = vmul.f32 %v134, %v985
  %v1111 = vmul.f32 %v135, %v989
  %v1112 = vmul.f32 %v136, %v985
  %v1113 = vmul.f32 %v137, %v989
  %v1114 = vmul.f32 %v138, %v985
  %v1115 = vmul.f32 %v139, %v989
  %v1116 = vmul.f32 %v140, %v985
  %v1117 = vmul.f32 %v141, %v989
  %v1119 = vlaneseq
  %v1120 = vshrl.u32 %v1119, 7
  %v1121 = vsub.s32 0, %v1120
  %v1122 = vrot.slane %v981, %v1121
  %v1123 = vlaneseq
  %v1124 = vshrl.u32 %v1123, 7
  %v1125 = vsub.s32 1, %v1124
  %v1126 = vrot.slane %v981, %v1125
  %v1129 = vadd.f32 %v990, %v1122
  %v1130 = vadd.f32 %v991, %v1126
  %v1131 = vadd.f32 %v992, %v1122
  %v1132 = vadd.f32 %v993, %v1126
  %v1133 = vadd.f32 %v994, %v1122
  %v1134 = vadd.f32 %v995, %v1126
  %v1135 = vadd.f32 %v996, %v1122
  %v1136 = vadd.f32 %v997, %v1126
  %v1137 = vadd.f32 %v998, %v1122
  %v1138 = vadd.f32 %v999, %v1126
  %v1139 = vadd.f32 %v1000, %v1122
  %v1140 = vadd.f32 %v1001, %v1126
  %v1141 = vadd.f32 %v1002, %v1122
  %v1142 = vadd.f32 %v1003, %v1126
  %v1143 = vadd.f32 %v1004, %v1122
  %v1144 = vadd.f32 %v1005, %v1126
  %v1145 = vadd.f32 %v1006, %v1122
  %v1146 = vadd.f32 %v1007, %v1126
  %v1147 = vadd.f32 %v1008, %v1122
  %v1148 = vadd.f32 %v1009, %v1126
  %v1149 = vadd.f32 %v1010, %v1122
  %v1150 = vadd.f32 %v1011, %v1126
  %v1151 = vadd.f32 %v1012, %v1122
  %v1152 = vadd.f32 %v1013, %v1126
  %v1153 = vadd.f32 %v1014, %v1122
  %v1154 = vadd.f32 %v1015, %v1126
  %v1155 = vadd.f32 %v1016, %v1122
  %v1156 = vadd.f32 %v1017, %v1126
  %v1157 = vadd.f32 %v1018, %v1122
  %v1158 = vadd.f32 %v1019, %v1126
  %v1159 = vadd.f32 %v1020, %v1122
  %v1160 = vadd.f32 %v1021, %v1126
  %v1161 = vadd.f32 %v1022, %v1122
  %v1162 = vadd.f32 %v1023, %v1126
  %v1163 = vadd.f32 %v1024, %v1122
  %v1164 = vadd.f32 %v1025, %v1126
  %v1165 = vadd.f32 %v1026, %v1122
  %v1166 = vadd.f32 %v1027, %v1126
  %v1167 = vadd.f32 %v1028, %v1122
  %v1168 = vadd.f32 %v1029, %v1126
  %v1169 = vadd.f32 %v1030, %v1122
  %v1170 = vadd.f32 %v1031, %v1126
  %v1171 = vadd.f32 %v1032, %v1122
  %v1172 = vadd.f32 %v1033, %v1126
  %v1173 = vadd.f32 %v1034, %v1122
  %v1174 = vadd.f32 %v1035, %v1126
  %v1175 = vadd.f32 %v1036, %v1122
  %v1176 = vadd.f32 %v1037, %v1126
  %v1177 = vadd.f32 %v1038, %v1122
  %v1178 = vadd.f32 %v1039, %v1126
  %v1179 = vadd.f32 %v1040, %v1122
  %v1180 = vadd.f32 %v1041, %v1126
  %v1181 = vadd.f32 %v1042, %v1122
  %v1182 = vadd.f32 %v1043, %v1126
  %v1183 = vadd.f32 %v1044, %v1122
  %v1184 = vadd.f32 %v1045, %v1126
  %v1185 = vadd.f32 %v1046, %v1122
  %v1186 = vadd.f32 %v1047, %v1126
  %v1187 = vadd.f32 %v1048, %v1122
  %v1188 = vadd.f32 %v1049, %v1126
  %v1189 = vadd.f32 %v1050, %v1122
  %v1190 = vadd.f32 %v1051, %v1126
  %v1191 = vadd.f32 %v1052, %v1122
  %v1192 = vadd.f32 %v1053, %v1126
  %v1193 = vadd.f32 %v1054, %v1122
  %v1194 = vadd.f32 %v1055, %v1126
  %v1195 = vadd.f32 %v1056, %v1122
  %v1196 = vadd.f32 %v1057, %v1126
  %v1197 = vadd.f32 %v1058, %v1122
  %v1198 = vadd.f32 %v1059, %v1126
  %v1199 = vadd.f32 %v1060, %v1122
  %v1200 = vadd.f32 %v1061, %v1126
  %v1201 = vadd.f32 %v1062, %v1122
  %v1202 = vadd.f32 %v1063, %v1126
  %v1203 = vadd.f32 %v1064, %v1122
  %v1204 = vadd.f32 %v1065, %v1126
  %v1205 = vadd.f32 %v1066, %v1122
  %v1206 = vadd.f32 %v1067, %v1126
  %v1207 = vadd.f32 %v1068, %v1122
  %v1208 = vadd.f32 %v1069, %v1126
  %v1209 = vadd.f32 %v1070, %v1122
  %v1210 = vadd.f32 %v1071, %v1126
  %v1211 = vadd.f32 %v1072, %v1122
  %v1212 = vadd.f32 %v1073, %v1126
  %v1213 = vadd.f32 %v1074, %v1122
  %v1214 = vadd.f32 %v1075, %v1126
  %v1215 = vadd.f32 %v1076, %v1122
  %v1216 = vadd.f32 %v1077, %v1126
  %v1217 = vadd.f32 %v1078, %v1122
  %v1218 = vadd.f32 %v1079, %v1126
  %v1219 = vadd.f32 %v1080, %v1122
  %v1220 = vadd.f32 %v1081, %v1126
  %v1221 = vadd.f32 %v1082, %v1122
  %v1222 = vadd.f32 %v1083, %v1126
  %v1223 = vadd.f32 %v1084, %v1122
  %v1224 = vadd.f32 %v1085, %v1126
  %v1225 = vadd.f32 %v1086, %v1122
  %v1226 = vadd.f32 %v1087, %v1126
  %v1227 = vadd.f32 %v1088, %v1122
  %v1228 = vadd.f32 %v1089, %v1126
  %v1229 = vadd.f32 %v1090, %v1122
  %v1230 = vadd.f32 %v1091, %v1126
  %v1231 = vadd.f32 %v1092, %v1122
  %v1232 = vadd.f32 %v1093, %v1126
  %v1233 = vadd.f32 %v1094, %v1122
  %v1234 = vadd.f32 %v1095, %v1126
  %v1235 = vadd.f32 %v1096, %v1122
  %v1236 = vadd.f32 %v1097, %v1126
  %v1237 = vadd.f32 %v1098, %v1122
  %v1238 = vadd.f32 %v1099, %v1126
  %v1239 = vadd.f32 %v1100, %v1122
  %v1240 = vadd.f32 %v1101, %v1126
  %v1241 = vadd.f32 %v1102, %v1122
  %v1242 = vadd.f32 %v1103, %v1126
  %v1243 = vadd.f32 %v1104, %v1122
  %v1244 = vadd.f32 %v1105, %v1126
  %v1245 = vadd.f32 %v1106, %v1122
  %v1246 = vadd.f32 %v1107, %v1126
  %v1247 = vadd.f32 %v1108, %v1122
  %v1248 = vadd.f32 %v1109, %v1126
  %v1249 = vadd.f32 %v1110, %v1122
  %v1250 = vadd.f32 %v1111, %v1126
  %v1251 = vadd.f32 %v1112, %v1122
  %v1252 = vadd.f32 %v1113, %v1126
  %v1253 = vadd.f32 %v1114, %v1122
  %v1254 = vadd.f32 %v1115, %v1126
  %v1255 = vadd.f32 %v1116, %v1122
  %v1256 = vadd.f32 %v1117, %v1126
  %1257 = vst [vmem:[%s3] sm:$0xff] %v1129
  %1258 = vst [vmem:[%s3 + $0x8] sm:$0xff] %v1130
  %1259 = vst [vmem:[%s3 + $0x10] sm:$0xff] %v1131
  %1260 = vst [vmem:[%s3 + $0x18] sm:$0xff] %v1132
  %1261 = vst [vmem:[%s3 + $0x20] sm:$0xff] %v1133
  %1262 = vst [vmem:[%s3 + $0x28] sm:$0xff] %v1134
  %1263 = vst [vmem:[%s3 + $0x30] sm:$0xff] %v1135
  %1264 = vst [vmem:[%s3 + $0x38] sm:$0xff] %v1136
  %1265 = vst [vmem:[%s3 + $0x40] sm:$0xff] %v1137
  %1266 = vst [vmem:[%s3 + $0x48] sm:$0xff] %v1138
  %1267 = vst [vmem:[%s3 + $0x50] sm:$0xff] %v1139
  %1268 = vst [vmem:[%s3 + $0x58] sm:$0xff] %v1140
  %1269 = vst [vmem:[%s3 + $0x60] sm:$0xff] %v1141
  %1270 = vst [vmem:[%s3 + $0x68] sm:$0xff] %v1142
  %1271 = vst [vmem:[%s3 + $0x70] sm:$0xff] %v1143
  %1272 = vst [vmem:[%s3 + $0x78] sm:$0xff] %v1144
  %1273 = vst [vmem:[%s3 + $0x80] sm:$0xff] %v1145
  %1274 = vst [vmem:[%s3 + $0x88] sm:$0xff] %v1146
  %1275 = vst [vmem:[%s3 + $0x90] sm:$0xff] %v1147
  %1276 = vst [vmem:[%s3 + $0x98] sm:$0xff] %v1148
  %1277 = vst [vmem:[%s3 + $0xa0] sm:$0xff] %v1149
  %1278 = vst [vmem:[%s3 + $0xa8] sm:$0xff] %v1150
  %1279 = vst [vmem:[%s3 + $0xb0] sm:$0xff] %v1151
  %1280 = vst [vmem:[%s3 + $0xb8] sm:$0xff] %v1152
  %1281 = vst [vmem:[%s3 + $0xc0] sm:$0xff] %v1153
  %1282 = vst [vmem:[%s3 + $0xc8] sm:$0xff] %v1154
  %1283 = vst [vmem:[%s3 + $0xd0] sm:$0xff] %v1155
  %1284 = vst [vmem:[%s3 + $0xd8] sm:$0xff] %v1156
  %1285 = vst [vmem:[%s3 + $0xe0] sm:$0xff] %v1157
  %1286 = vst [vmem:[%s3 + $0xe8] sm:$0xff] %v1158
  %1287 = vst [vmem:[%s3 + $0xf0] sm:$0xff] %v1159
  %1288 = vst [vmem:[%s3 + $0xf8] sm:$0xff] %v1160
  %1289 = vst [vmem:[%s3 + $0x100] sm:$0xff] %v1161
  %1290 = vst [vmem:[%s3 + $0x108] sm:$0xff] %v1162
  %1291 = vst [vmem:[%s3 + $0x110] sm:$0xff] %v1163
  %1292 = vst [vmem:[%s3 + $0x118] sm:$0xff] %v1164
  %1293 = vst [vmem:[%s3 + $0x120] sm:$0xff] %v1165
  %1294 = vst [vmem:[%s3 + $0x128] sm:$0xff] %v1166
  %1295 = vst [vmem:[%s3 + $0x130] sm:$0xff] %v1167
  %1296 = vst [vmem:[%s3 + $0x138] sm:$0xff] %v1168
  %1297 = vst [vmem:[%s3 + $0x140] sm:$0xff] %v1169
  %1298 = vst [vmem:[%s3 + $0x148] sm:$0xff] %v1170
  %1299 = vst [vmem:[%s3 + $0x150] sm:$0xff] %v1171
  %1300 = vst [vmem:[%s3 + $0x158] sm:$0xff] %v1172
  %1301 = vst [vmem:[%s3 + $0x160] sm:$0xff] %v1173
  %1302 = vst [vmem:[%s3 + $0x168] sm:$0xff] %v1174
  %1303 = vst [vmem:[%s3 + $0x170] sm:$0xff] %v1175
  %1304 = vst [vmem:[%s3 + $0x178] sm:$0xff] %v1176
  %1305 = vst [vmem:[%s3 + $0x180] sm:$0xff] %v1177
  %1306 = vst [vmem:[%s3 + $0x188] sm:$0xff] %v1178
  %1307 = vst [vmem:[%s3 + $0x190] sm:$0xff] %v1179
  %1308 = vst [vmem:[%s3 + $0x198] sm:$0xff] %v1180
  %1309 = vst [vmem:[%s3 + $0x1a0] sm:$0xff] %v1181
  %1310 = vst [vmem:[%s3 + $0x1a8] sm:$0xff] %v1182
  %1311 = vst [vmem:[%s3 + $0x1b0] sm:$0xff] %v1183
  %1312 = vst [vmem:[%s3 + $0x1b8] sm:$0xff] %v1184
  %1313 = vst [vmem:[%s3 + $0x1c0] sm:$0xff] %v1185
  %1314 = vst [vmem:[%s3 + $0x1c8] sm:$0xff] %v1186
  %1315 = vst [vmem:[%s3 + $0x1d0] sm:$0xff] %v1187
  %1316 = vst [vmem:[%s3 + $0x1d8] sm:$0xff] %v1188
  %1317 = vst [vmem:[%s3 + $0x1e0] sm:$0xff] %v1189
  %1318 = vst [vmem:[%s3 + $0x1e8] sm:$0xff] %v1190
  %1319 = vst [vmem:[%s3 + $0x1f0] sm:$0xff] %v1191
  %1320 = vst [vmem:[%s3 + $0x1f8] sm:$0xff] %v1192
  %1321 = vst [vmem:[%s3 + $0x200] sm:$0xff] %v1193
  %1322 = vst [vmem:[%s3 + $0x208] sm:$0xff] %v1194
  %1323 = vst [vmem:[%s3 + $0x210] sm:$0xff] %v1195
  %1324 = vst [vmem:[%s3 + $0x218] sm:$0xff] %v1196
  %1325 = vst [vmem:[%s3 + $0x220] sm:$0xff] %v1197
  %1326 = vst [vmem:[%s3 + $0x228] sm:$0xff] %v1198
  %1327 = vst [vmem:[%s3 + $0x230] sm:$0xff] %v1199
  %1328 = vst [vmem:[%s3 + $0x238] sm:$0xff] %v1200
  %1329 = vst [vmem:[%s3 + $0x240] sm:$0xff] %v1201
  %1330 = vst [vmem:[%s3 + $0x248] sm:$0xff] %v1202
  %1331 = vst [vmem:[%s3 + $0x250] sm:$0xff] %v1203
  %1332 = vst [vmem:[%s3 + $0x258] sm:$0xff] %v1204
  %1333 = vst [vmem:[%s3 + $0x260] sm:$0xff] %v1205
  %1334 = vst [vmem:[%s3 + $0x268] sm:$0xff] %v1206
  %1335 = vst [vmem:[%s3 + $0x270] sm:$0xff] %v1207
  %1336 = vst [vmem:[%s3 + $0x278] sm:$0xff] %v1208
  %1337 = vst [vmem:[%s3 + $0x280] sm:$0xff] %v1209
  %1338 = vst [vmem:[%s3 + $0x288] sm:$0xff] %v1210
  %1339 = vst [vmem:[%s3 + $0x290] sm:$0xff] %v1211
  %1340 = vst [vmem:[%s3 + $0x298] sm:$0xff] %v1212
  %1341 = vst [vmem:[%s3 + $0x2a0] sm:$0xff] %v1213
  %1342 = vst [vmem:[%s3 + $0x2a8] sm:$0xff] %v1214
  %1343 = vst [vmem:[%s3 + $0x2b0] sm:$0xff] %v1215
  %1344 = vst [vmem:[%s3 + $0x2b8] sm:$0xff] %v1216
  %1345 = vst [vmem:[%s3 + $0x2c0] sm:$0xff] %v1217
  %1346 = vst [vmem:[%s3 + $0x2c8] sm:$0xff] %v1218
  %1347 = vst [vmem:[%s3 + $0x2d0] sm:$0xff] %v1219
  %1348 = vst [vmem:[%s3 + $0x2d8] sm:$0xff] %v1220
  %1349 = vst [vmem:[%s3 + $0x2e0] sm:$0xff] %v1221
  %1350 = vst [vmem:[%s3 + $0x2e8] sm:$0xff] %v1222
  %1351 = vst [vmem:[%s3 + $0x2f0] sm:$0xff] %v1223
  %1352 = vst [vmem:[%s3 + $0x2f8] sm:$0xff] %v1224
  %1353 = vst [vmem:[%s3 + $0x300] sm:$0xff] %v1225
  %1354 = vst [vmem:[%s3 + $0x308] sm:$0xff] %v1226
  %1355 = vst [vmem:[%s3 + $0x310] sm:$0xff] %v1227
  %1356 = vst [vmem:[%s3 + $0x318] sm:$0xff] %v1228
  %1357 = vst [vmem:[%s3 + $0x320] sm:$0xff] %v1229
  %1358 = vst [vmem:[%s3 + $0x328] sm:$0xff] %v1230
  %1359 = vst [vmem:[%s3 + $0x330] sm:$0xff] %v1231
  %1360 = vst [vmem:[%s3 + $0x338] sm:$0xff] %v1232
  %1361 = vst [vmem:[%s3 + $0x340] sm:$0xff] %v1233
  %1362 = vst [vmem:[%s3 + $0x348] sm:$0xff] %v1234
  %1363 = vst [vmem:[%s3 + $0x350] sm:$0xff] %v1235
  %1364 = vst [vmem:[%s3 + $0x358] sm:$0xff] %v1236
  %1365 = vst [vmem:[%s3 + $0x360] sm:$0xff] %v1237
  %1366 = vst [vmem:[%s3 + $0x368] sm:$0xff] %v1238
  %1367 = vst [vmem:[%s3 + $0x370] sm:$0xff] %v1239
  %1368 = vst [vmem:[%s3 + $0x378] sm:$0xff] %v1240
  %1369 = vst [vmem:[%s3 + $0x380] sm:$0xff] %v1241
  %1370 = vst [vmem:[%s3 + $0x388] sm:$0xff] %v1242
  %1371 = vst [vmem:[%s3 + $0x390] sm:$0xff] %v1243
  %1372 = vst [vmem:[%s3 + $0x398] sm:$0xff] %v1244
  %1373 = vst [vmem:[%s3 + $0x3a0] sm:$0xff] %v1245
  %1374 = vst [vmem:[%s3 + $0x3a8] sm:$0xff] %v1246
  %1375 = vst [vmem:[%s3 + $0x3b0] sm:$0xff] %v1247
  %1376 = vst [vmem:[%s3 + $0x3b8] sm:$0xff] %v1248
  %1377 = vst [vmem:[%s3 + $0x3c0] sm:$0xff] %v1249
  %1378 = vst [vmem:[%s3 + $0x3c8] sm:$0xff] %v1250
  %1379 = vst [vmem:[%s3 + $0x3d0] sm:$0xff] %v1251
  %1380 = vst [vmem:[%s3 + $0x3d8] sm:$0xff] %v1252
  %1381 = vst [vmem:[%s3 + $0x3e0] sm:$0xff] %v1253
  %1382 = vst [vmem:[%s3 + $0x3e8] sm:$0xff] %v1254
  %1383 = vst [vmem:[%s3 + $0x3f0] sm:$0xff] %v1255
  %1384 = vst [vmem:[%s3 + $0x3f8] sm:$0xff] %v1256
  // Predicated region
  $region14: #{tpu_custom_call.1} parent=0 // pred_check
    _
  $region15: #{tpu_custom_call.1} parent=0 // pred_check_branch
    %1386 = sbr.rel (0) target = $region17
  $region16: #{tpu_custom_call.1} parent=0 // pred_region
    _
  $region17: #{tpu_custom_call.1} parent=0 // pred_fallthru
    _
  // Predicated region
  $region18: #{tpu_custom_call.1} parent=0 // pred_check
    _
  $region19: #{tpu_custom_call.1} parent=0 // pred_check_branch
    %1388 = sbr.rel (0) target = $region21
  $region20: #{tpu_custom_call.1} parent=0 // pred_region
    _
  $region21: #{tpu_custom_call.1} parent=0 // pred_fallthru
    _

</llo_original>
